<compile_context>
chip_gen: v5e
topology: v5e:2x2
jax: 0.10.0
libtpu: 0.0.40
codegen_flags: <defaults>
</compile_context>

<pallas_src>
import jax
import jax.numpy as jnp
from jax.experimental import pallas as pl
from jax.experimental.pallas import tpu as pltpu

_LANE = 128
_SUBLANE = 8
_MAX_BLOCK_B = 8192  # amortizes the ~0.35us per-grid-step overhead


def _round_up(x, m):
    return (x + m - 1) // m * m


def anchornet_kernel(h_ref, w_ref, b_ref, x_ref, o_ref):
    # Linear (MXU, f32 accumulate): (bB, in_dim) @ (in_dim, out_dim) + (1, out_dim).
    logits = jnp.dot(h_ref[...], w_ref[...], preferred_element_type=jnp.float32)
    logits = logits + b_ref[...].astype(jnp.float32)

    # Numerically stable, *unnormalized* softmax weights over out_dim (lane axis).
    e = jnp.exp(logits - jnp.max(logits, axis=-1, keepdims=True))            # (bB, out_dim)

    # Deferred normalization: reduce numerator and denominator over out_dim, then one
    # exact divide on the small lane-dense results (kernel is DMA-bound -> divide is free).
    num = jnp.sum(x_ref[...].astype(jnp.float32) * e[None, :, :], axis=-1)   # (2, bB)
    den = jnp.sum(e[None, :, :], axis=-1)                                    # (1, bB)
    o_ref[...] = (num / den).astype(o_ref.dtype)


def _vmem_capacity_bytes():
    try:
        cap = int(pltpu.get_tpu_info().vmem_capacity_bytes)
        if cap > 0:
            return cap
    except Exception:
        pass
    return 64 * 1024 * 1024  # conservative fallback (v7x-sized VMEM)


def _plan_tiling(B, in_dim, out_dim, h_isize, x_isize, w_isize):
    """Pick (block_b, vmem_limit_bytes) accounting for lane/sublane padding in VMEM."""
    cap = _vmem_capacity_bytes()
    # 48 MiB on v7x (64 MiB physical), 96 MiB on v5e/v6e (128 MiB physical).
    vmem_limit = min(int(0.75 * cap), cap - (8 << 20))

    in_pad = _round_up(in_dim, _LANE)    # lane padding of the hidden block
    out_pad = _round_up(out_dim, _LANE)  # lane padding of the x / logits blocks

    # Resident weight + bias (constant index_map; the pipeline still double-buffers them).
    # TODO(synk): single-buffer these via pipeline_mode=pl.Buffered(1) once validated;
    # the budget conservatively counts two buffers.
    resident = 2 * w_isize * (_round_up(in_dim, _SUBLANE) + _SUBLANE) * out_pad

    # Streamed VMEM per batch row (double-buffered): hidden, x (2 components), output row.
    streamed = 2 * (in_pad * h_isize + 2 * out_pad * x_isize + _SUBLANE * 4)
    # f32 in-kernel temporaries per row (logits, e, upcast x, numerator product).
    scratch = 6 * out_pad * 4

    budget = vmem_limit - resident - (4 << 20)  # headroom for Mosaic internals
    if budget <= 0:
        # TODO(synk): add an in_dim reduction grid axis ("arbitrary", last) with an f32
        # accumulator + pl.when init/finalize when the resident weight outgrows VMEM.
        raise ValueError("AnchorNet weight too large to keep resident in VMEM")
    max_rows = min(int(budget // (streamed + scratch)), _MAX_BLOCK_B)

    if B <= max_rows and B < 2 * _LANE:
        return B, vmem_limit  # single full-batch block (full-dim blocks are exempt from 8/128)
    if max_rows < _LANE:
        raise ValueError("VMEM budget too small for a 128-row batch block")
    # Aim for >= 2 blocks so ("parallel",) shards the batch over both v7x TensorCores;
    # multi-block lane-dense (2, block_b) output requires block_b % 128 == 0.
    target = min(max_rows, _round_up(pl.cdiv(B, 2), _LANE))
    return max(_LANE, (target // _LANE) * _LANE), vmem_limit


def anchornet_forward_pretransposed(x_t, hidden, weight, bias):
    """Preferred entry: x_t already laid out as (2, B, out_dim). Returns (B, 2)."""
    two, B, out_dim = x_t.shape
    assert two == 2
    in_dim = hidden.shape[1]

    block_b, vmem_limit = _plan_tiling(
        B, in_dim, out_dim,
        jnp.dtype(hidden.dtype).itemsize,
        jnp.dtype(x_t.dtype).itemsize,
        jnp.dtype(weight.dtype).itemsize,
    )
    grid = (pl.cdiv(B, block_b),)
    bias2d = bias.reshape(1, out_dim)

    cost = pl.CostEstimate(
        flops=2 * B * in_dim * out_dim + 8 * B * out_dim,
        transcendentals=B * out_dim,
        bytes_accessed=(
            B * in_dim * jnp.dtype(hidden.dtype).itemsize
            + (in_dim + 1) * out_dim * jnp.dtype(weight.dtype).itemsize
            + 2 * B * out_dim * jnp.dtype(x_t.dtype).itemsize
            + 2 * B * jnp.dtype(x_t.dtype).itemsize
        ),
    )

    out_t = pl.pallas_call(
        anchornet_kernel,
        out_shape=jax.ShapeDtypeStruct((2, B), x_t.dtype),
        grid_spec=pltpu.PrefetchScalarGridSpec(
            num_scalar_prefetch=0,
            grid=grid,
            in_specs=[
                pl.BlockSpec((block_b, in_dim), lambda i: (i, 0)),          # hidden: streamed
                pl.BlockSpec((in_dim, out_dim), lambda i: (0, 0)),          # weight: resident
                pl.BlockSpec((1, out_dim), lambda i: (0, 0)),               # bias: resident
                pl.BlockSpec((2, block_b, out_dim), lambda i: (0, i, 0)),   # x: streamed
            ],
            out_specs=pl.BlockSpec((2, block_b), lambda i: (0, i)),         # lane-dense slab
        ),
        compiler_params=pltpu.CompilerParams(
            dimension_semantics=("parallel",),
            vmem_limit_bytes=vmem_limit,
        ),
        cost_estimate=cost,
    )(hidden, weight, bias2d, x_t)

    return out_t.T  # (B, 2)


def anchornet_forward(x, hidden, weight, bias):
    """Module-compatible entry. x: (B, out_dim, 2), hidden: (B, in_dim) -> (B, 2).

    The minor-dim transpose of x costs one extra HBM pass; producers that can emit x
    in (2, B, out_dim) layout should call anchornet_forward_pretransposed directly.
    """
    return anchornet_forward_pretransposed(
        jnp.transpose(x, (2, 0, 1)), hidden, weight, bias)


def anchornet_reference(x, hidden, weight, bias):
    logits = hidden @ weight + bias[None, :]
    attn = jax.nn.softmax(logits, axis=1)
    return jnp.einsum("bo,bod->bd", attn, x)


if __name__ == "__main__":
    B, in_dim, out_dim = 2, 32, 16

    key = jax.random.PRNGKey(0)
    kx, kh, kw, kb = jax.random.split(key, 4)

    # Deterministic synthetic parameters (Linear(in_dim, out_dim)).
    bound = 1.0 / (in_dim ** 0.5)
    weight = jax.random.uniform(kw, (in_dim, out_dim), jnp.float32, -bound, bound)
    bias = jax.random.uniform(kb, (out_dim,), jnp.float32, -bound, bound)

    # Inputs matching the module's forward signature.
    x = jax.random.normal(kx, (B, out_dim, 2), jnp.float32)
    hidden = jax.random.normal(kh, (B, in_dim), jnp.float32)

    out = anchornet_forward(x, hidden, weight, bias)
    jax.block_until_ready(out)

    ref = anchornet_reference(x, hidden, weight, bias)
    assert out.shape == (B, 2)
    # Exact in-kernel divide now (no approx reciprocal) -> tight tolerance.
    assert jnp.allclose(out, ref, atol=2e-4, rtol=2e-4), float(jnp.max(jnp.abs(out - ref)))

    print("KERNEL_OK")
</pallas_src>

<mosaic_0001>
module attributes {stable_mosaic.version = 11 : i64} {
  func.func @anchornet_kernel(%arg0: i32, %arg1: memref<2x32xf32, #tpu.memory_space<vmem>>, %arg2: memref<32x16xf32, #tpu.memory_space<vmem>>, %arg3: memref<1x16xf32, #tpu.memory_space<vmem>>, %arg4: memref<2x2x16xf32, #tpu.memory_space<vmem>>, %arg5: memref<2x2xf32, #tpu.memory_space<vmem>>) attributes {dimension_semantics = [#tpu.dimension_semantics<parallel>], iteration_bounds = array<i64: 1>, scalar_prefetch = 0 : i64, scratch_operands = 0 : i64, tpu.core_type = #tpu.core_type<tc>, window_params = [{transform_indices = @transform_0, window_bounds = array<i64: 2, 32>}, {pipeline_mode = #tpu.pipeline_mode<synchronous>, transform_indices = @transform_1, window_bounds = array<i64: 32, 16>}, {pipeline_mode = #tpu.pipeline_mode<synchronous>, transform_indices = @transform_2, window_bounds = array<i64: 1, 16>}, {transform_indices = @transform_3, window_bounds = array<i64: 2, 2, 16>}, {transform_indices = @transform_4, window_bounds = array<i64: 2, 2>}]} {
    %c0 = arith.constant 0 : index
    %c0_0 = arith.constant 0 : index
    %0 = vector.load %arg1[%c0, %c0_0] : memref<2x32xf32, #tpu.memory_space<vmem>>, vector<2x32xf32>
    %c0_1 = arith.constant 0 : index
    %c0_2 = arith.constant 0 : index
    %1 = vector.load %arg2[%c0_1, %c0_2] : memref<32x16xf32, #tpu.memory_space<vmem>>, vector<32x16xf32>
    %cst = arith.constant dense<0.000000e+00> : vector<2x16xf32>
    %2 = tpu.matmul %0, %1, %cst {dimension_numbers = #tpu.dot_dimension_numbers<[1], [0], [0], [1], [0, 0, 1, 1], [], []>} : vector<2x32xf32>, vector<32x16xf32>, vector<2x16xf32> -> vector<2x16xf32>
    %c0_3 = arith.constant 0 : index
    %c0_4 = arith.constant 0 : index
    %3 = vector.load %arg3[%c0_3, %c0_4] : memref<1x16xf32, #tpu.memory_space<vmem>>, vector<1x16xf32>
    %4 = vector.broadcast %3 : vector<1x16xf32> to vector<2x16xf32>
    %5 = arith.addf %2, %4 : vector<2x16xf32>
    %cst_5 = arith.constant dense<0xFF800000> : vector<2xf32>
    %6 = vector.multi_reduction <maximumf>, %5, %cst_5 [1] : vector<2x16xf32> to vector<2xf32>
    %7 = vector.shape_cast %6 : vector<2xf32> to vector<2x1xf32>
    %8 = vector.broadcast %7 : vector<2x1xf32> to vector<2x16xf32>
    %9 = arith.subf %5, %8 : vector<2x16xf32>
    %10 = math.exp %9 : vector<2x16xf32>
    %c0_6 = arith.constant 0 : index
    %c0_7 = arith.constant 0 : index
    %c0_8 = arith.constant 0 : index
    %11 = vector.load %arg4[%c0_6, %c0_7, %c0_8] : memref<2x2x16xf32, #tpu.memory_space<vmem>>, vector<2x2x16xf32>
    %12 = vector.shape_cast %10 : vector<2x16xf32> to vector<1x2x16xf32>
    %13 = vector.broadcast %12 : vector<1x2x16xf32> to vector<2x2x16xf32>
    %14 = arith.mulf %11, %13 : vector<2x2x16xf32>
    %cst_9 = arith.constant dense<0.000000e+00> : vector<2x2xf32>
    %15 = vector.multi_reduction <add>, %14, %cst_9 [2] : vector<2x2x16xf32> to vector<2x2xf32>
    %16 = vector.shape_cast %10 : vector<2x16xf32> to vector<1x2x16xf32>
    %cst_10 = arith.constant dense<0.000000e+00> : vector<1x2xf32>
    %17 = vector.multi_reduction <add>, %16, %cst_10 [2] : vector<1x2x16xf32> to vector<1x2xf32>
    %18 = vector.broadcast %17 : vector<1x2xf32> to vector<2x2xf32>
    %19 = arith.divf %15, %18 : vector<2x2xf32>
    %c0_11 = arith.constant 0 : index
    %c0_12 = arith.constant 0 : index
    %20 = vector.load %arg5[%c0_11, %c0_12] : memref<2x2xf32, #tpu.memory_space<vmem>>, vector<2x2xf32>
    tpu.vector_store %arg5[%c0_11, %c0_12], %19 {strides = array<i32>} : memref<2x2xf32, #tpu.memory_space<vmem>>, vector<2x2xf32>,
    return
  }
  func.func @transform_0(%arg0: i32) -> (i32, i32) {
    %c0_i32 = arith.constant 0 : i32
    %c0_i32_0 = arith.constant 0 : i32
    return %arg0, %c0_i32 : i32, i32
  }
  func.func @transform_1(%arg0: i32) -> (i32, i32) {
    %c0_i32 = arith.constant 0 : i32
    %c0_i32_0 = arith.constant 0 : i32
    %c0_i32_1 = arith.constant 0 : i32
    return %c0_i32, %c0_i32_0 : i32, i32
  }
  func.func @transform_2(%arg0: i32) -> (i32, i32) {
    %c0_i32 = arith.constant 0 : i32
    %c0_i32_0 = arith.constant 0 : i32
    %c0_i32_1 = arith.constant 0 : i32
    return %c0_i32, %c0_i32_0 : i32, i32
  }
  func.func @transform_3(%arg0: i32) -> (i32, i32, i32) {
    %c0_i32 = arith.constant 0 : i32
    %c0_i32_0 = arith.constant 0 : i32
    %c0_i32_1 = arith.constant 0 : i32
    return %c0_i32, %arg0, %c0_i32_0 : i32, i32, i32
  }
  func.func @transform_4(%arg0: i32) -> (i32, i32) {
    %c0_i32 = arith.constant 0 : i32
    %c0_i32_0 = arith.constant 0 : i32
    return %c0_i32, %arg0 : i32, i32
  }
}

</mosaic_0001>

<llo_original>
// kernel: tpu_custom_call.1
$region0: #{tpu_custom_call.1}
  #allocation0 [shape = 'u32[]', space=smem, size = 0x4, offset = 0x4, fixed_abs, tag = 'smem constant byte address 0x4 - core index']
  #allocation1 [shape = 'u32[72,128]{1,0:T(1,128)}', space=vmem, size = 0x9000, scoped, tag = 'internal scratch']
  %s0 = inlined_call_operand.vmem [shape: f32[2,32], index: 0, kind: input, shape index: {}]
  %s1 = inlined_call_operand.vmem [shape: f32[32,16], index: 1, kind: input, shape index: {}]
  %s2 = inlined_call_operand.vmem [shape: f32[1,16], index: 2, kind: input, shape index: {}]
  %s3 = inlined_call_operand.vmem [shape: f32[2,2,16], index: 3, kind: input, shape index: {}]
  %s4 = inlined_call_operand.hbm [shape: f32[2,2], index: 4, kind: output, shape index: {}]
  %s5 = sld [smem:[#allocation0]]
  $region26: #{tpu_custom_call.1} parent=0
    _
  %s7 = ssub.s32 1, %s5
  %s8 = scalar_select 0, %s7, %s5
  $region1: #{tpu_custom_call.1} parent=0
    #allocation2 [shape = 'u8[1024]{0}', space=vmem, size = 0x400, scoped, tag = 'output window, operand 0, single buffered']
    #allocation3 [shape = 's32[1]{0}', space=sflag, size = 0x4, scoped, tag = 'scoped memory for tpu_custom_call.1']
    %9 = vsyncpa [#allocation3], 0
    // Predicated region
    $region2: #{tpu_custom_call.1} parent=1 // pred_check
      _
    $region3: #{tpu_custom_call.1} parent=1 // pred_check_branch
      %11 = sbr.rel (0) target = $region5
    $region4: #{tpu_custom_call.1} parent=1 // pred_region
      _
    $region5: #{tpu_custom_call.1} parent=1 // pred_fallthru
      _
    // Predicated region
    $region6: #{tpu_custom_call.1} parent=1 // pred_check
      _
    $region7: #{tpu_custom_call.1} parent=1 // pred_check_branch
      %13 = sbr.rel (0) target = $region9
    $region8: #{tpu_custom_call.1} parent=1 // pred_region
      _
    $region9: #{tpu_custom_call.1} parent=1 // pred_fallthru
      _
    // Predicated region
    $region10: #{tpu_custom_call.1} parent=1 // pred_check
      _
    $region11: #{tpu_custom_call.1} parent=1 // pred_check_branch
      %15 = sbr.rel (0) target = $region13
    $region12: #{tpu_custom_call.1} parent=1 // pred_region
      _
    $region13: #{tpu_custom_call.1} parent=1 // pred_fallthru
      _
    // Predicated region
    $region14: #{tpu_custom_call.1} parent=1 // pred_check
      _
    $region15: #{tpu_custom_call.1} parent=1 // pred_check_branch
      %17 = sbr.rel (0) target = $region17
    $region16: #{tpu_custom_call.1} parent=1 // pred_region
      _
    $region17: #{tpu_custom_call.1} parent=1 // pred_fallthru
      _
    %v18 = vld [vmem:[%s0] sm:$0x3]
    %v19 = vld [vmem:[%s1] sm:$0xff]
    %v20 = vld [vmem:[%s1 + $0x8] sm:$0xff]
    %v21 = vld [vmem:[%s1 + $0x10] sm:$0xff]
    %v22 = vld [vmem:[%s1 + $0x18] sm:$0xff]
    %v23 = vld [vmem:[%s2] sm:$0x1]
    %v25 = vperm.slane %v23, 0
    %vm27 = vcmask 261120
    %v29 = vsel %vm27, %v18, 0
    %31 = vmatpush.msra.mxu0 0.0
    %32 = vmatpush.msra.mxu0 0.0
    %33 = vmatpush.msra.mxu0 0.0
    %34 = vmatpush.msra.mxu0 0.0
    %35 = vmatpush.msra.mxu0 0.0
    %36 = vmatpush.msra.mxu0 0.0
    %37 = vmatpush.msra.mxu0 0.0
    %38 = vmatpush.msra.mxu0 0.0
    %39 = vmatpush.msra.mxu0 0.0
    %40 = vmatpush.msra.mxu0 0.0
    %41 = vmatpush.msra.mxu0 0.0
    %42 = vmatpush.msra.mxu0 0.0
    %43 = vmatpush.msra.mxu0 %v22
    %44 = vmatpush.msra.mxu0 %v21
    %45 = vmatpush.msra.mxu0 %v20
    %46 = vmatpush.msra.mxu0 %v19
    %47 = vmatmul.f32.gmra.mxu0 %v29
    %v48 = vpop.f32.mrf.mxu0
    %v49 = vadd.f32 %v25, %v48
    %50 = vdwg.mxu0
    %vm51 = vcmask 123904
    %v52 = vsel %vm51, %v49, -inf
    %53 = vmax.xlane.f32.xlu0 %v52
    %v54 = vpop.xlane.xlu0 %53
    %v55 = vsub.f32 %v49, %v54
    %v56 = vmul.f32 %v55, 1.442695
    %v57 = vpow.pop %v56
    %v58 = vld [vmem:[%s3] sm:$0x3]
    %v59 = vld [vmem:[%s3 + $0x2] sm:$0x3]
    %v60 = vmul.f32 %v58, %v57
    %v61 = vmul.f32 %v59, %v57
    %v62 = vsel %vm51, %v60, 0.0
    %63 = vadd.xlane.f32.xlu0 %v62
    %v64 = vpop.xlane.xlu0 %63
    %v65 = vsel %vm51, %v61, 0.0
    %66 = vadd.xlane.f32.xlu0 %v65
    %v67 = vpop.xlane.xlu0 %66
    %v68 = vsel %vm51, %v57, 0.0
    %69 = vadd.xlane.f32.xlu0 %v68
    %v70 = vpop.xlane.xlu0 %69
    %v71 = vrcp.pop %v70
    %v72 = vmul.f32 %v70, %v71
    %v73 = vsub.f32 1.0, %v72
    %v74 = vmul.f32 %v71, %v73
    %v75 = vadd.f32 %v71, %v74
    %vm76 = vweird.f32 %v70
    %vm77 = vweird.f32 %v71
    %vm78 = vmor %vm76, %vm77
    %v79 = vsel %vm78, %v71, %v75
    %v80 = vand.u32 2147483647, %v70
    %vm81 = vcmp.eq.f32.partialorder %v80, 8.507059e+37
    %v82 = vand.u32 %v70, 2147483648
    %v83 = vor.u32 1.1754944e-38, %v82
    %v84 = vsel %vm81, %v83, %v79
    %v85 = vmul.f32 %v64, %v84
    %v86 = vmul.f32 %v67, %v84
    %v89 = vlaneseq
    %v90 = vand.u32 %v89, 127
    %v91 = vperm.slane %v85, %v90
    %v92 = vperm.slane %v86, %v90
    %vm93 = vcmask 1041409
    %v94 = vsel %vm93, %v92, %v91
    %vm96 = vcmask 9216
    %97 = vst.msk [vmem:[#allocation2] sm:$0x3] %vm96, %v94
    // Predicated region
    $region18: #{tpu_custom_call.1} parent=1 // pred_check
      _
    $region19: #{tpu_custom_call.1} parent=1 // pred_check_branch
      %99 = sbr.rel (0) target = $region21
    $region20: #{tpu_custom_call.1} parent=1 // pred_region
      %101 = vsyncadd [#allocation3], 0
      %s103 = sshll.u32 [#allocation2], 4
      %s104 = int_to_ptr.vmem [resolvable:$true] %s103
      %s105 = sshll.u32 %s4, 4
      %s106 = int_to_ptr.hbm [resolvable:$true] %s105
      %108 = dma.vmem_to_hbm [thread:$0]  %s104, 32, %s106, [#allocation3]
    $region21: #{tpu_custom_call.1} parent=1 // pred_fallthru
      _
    // Predicated region
    $region22: #{tpu_custom_call.1} parent=1 // pred_check
      _
    $region23: #{tpu_custom_call.1} parent=1 // pred_check_branch
      %110 = sbr.rel (0) target = $region25
    $region24: #{tpu_custom_call.1} parent=1 // pred_region
      %112 = dma.done [#allocation3], 32
    $region25: #{tpu_custom_call.1} parent=1 // pred_fallthru
      _
    %113 = vsyncpa [#allocation3], 1

</llo_original>
